<compile_context>
chip_gen: v7x
topology: tpu7x:2x2x1
jax: 0.10.0
libtpu: 0.0.40
codegen_flags: <defaults>
</compile_context>

<pallas_src>
import jax
import jax.numpy as jnp
from jax import lax
from jax.experimental import pallas as pl
from jax.experimental.pallas import tpu as pltpu


def _round_up(x, m):
    return ((x + m - 1) // m) * m


def _bpnet_kernel(x_ref, w1_ref, b1_ref, w2_ref, b2_ref, o_ref):
    n_out = o_ref.shape[-1]

    # hidden = relu(x @ W1 + b1): MXU dot with f32 accumulate; bias/relu on VPU.
    # Cast x in-kernel so both MXU operands match (no-op in the f32 path).
    x = x_ref[...].astype(w1_ref.dtype)
    h = jnp.dot(x, w1_ref[...], preferred_element_type=jnp.float32,
                precision=lax.Precision.HIGHEST)
    h = jnp.maximum(h + b1_ref[...], 0.0)

    # logits = h @ W2 + b2. Padded class columns of b2 hold -1e30, so they
    # vanish in the softmax (W2's padded rows/cols are zero -> exact).
    logits = jnp.dot(h.astype(w2_ref.dtype), w2_ref[...],
                     preferred_element_type=jnp.float32,
                     precision=lax.Precision.HIGHEST)
    logits = logits + b2_ref[...]

    # Numerically stable softmax over the class axis (128-lane registers).
    m = jnp.max(logits, axis=1, keepdims=True)
    e = jnp.exp(logits - m)
    denom = jnp.sum(e, axis=1, keepdims=True)
    probs = e * pl.reciprocal(denom, approx=False)

    # Store only the real classes (block last dim == full array dim, so legal).
    o_ref[...] = probs[:, :n_out].astype(o_ref.dtype)


def bpnet_forward(x, w1, b1, w2, b2, *, block_batch=1024, use_bf16=False,
                  out_dtype=jnp.float32):
    """x: (B, F) f32; w1: (F, H); b1: (1, H); w2: (H, C); b2: (1, C)."""
    B, F = x.shape
    H = w1.shape[1]
    C = w2.shape[1]

    # Lane-dense padding of the (tiny, one-time) weights only; zero padding of
    # the hidden axis is exact: relu(0 + 0) = 0 and zero rows of W2 add 0.
    H_pad = _round_up(H, 128)
    C_pad = _round_up(C, 128)

    w1p = jnp.zeros((F, H_pad), jnp.float32).at[:, :H].set(w1)
    b1p = jnp.zeros((1, H_pad), jnp.float32).at[:, :H].set(b1)
    w2p = jnp.zeros((H_pad, C_pad), jnp.float32).at[:H, :C].set(w2)
    # Padded class columns get a huge negative bias -> exp(.) == 0 in softmax.
    b2p = jnp.full((1, C_pad), -1e30, jnp.float32).at[:, :C].set(b2)

    if use_bf16:
        # bf16 MXU operands are valid on v5e/v6e/v7x. Only the weights are
        # cast here; x is cast inside the kernel to avoid an extra HBM pass.
        w1p = w1p.astype(jnp.bfloat16)
        w2p = w2p.astype(jnp.bfloat16)

    # Batch tiling over the ORIGINAL x (no padded copy): Pallas clips the
    # ragged last block (OOB reads feed rows that are never written back).
    TB = min(block_batch, _round_up(B, 8))
    n_steps = pl.cdiv(B, TB)
    if n_steps > 1 and n_steps % 2:
        n_steps += 1  # even step count -> balanced halves for v7x's 2 TCs
    TB = min(_round_up(pl.cdiv(B, n_steps), 8), _round_up(B, 8))
    grid = (pl.cdiv(B, TB),)

    out = pl.pallas_call(
        _bpnet_kernel,
        out_shape=jax.ShapeDtypeStruct((B, C), out_dtype),
        grid_spec=pltpu.PrefetchScalarGridSpec(
            num_scalar_prefetch=0,
            grid=grid,
            in_specs=[
                pl.BlockSpec((TB, F), lambda i: (i, 0)),         # x: batch-tiled
                pl.BlockSpec((F, H_pad), lambda i: (0, 0)),      # W1: resident
                pl.BlockSpec((1, H_pad), lambda i: (0, 0)),      # b1: resident
                pl.BlockSpec((H_pad, C_pad), lambda i: (0, 0)),  # W2: resident
                pl.BlockSpec((1, C_pad), lambda i: (0, 0)),      # b2: resident
            ],
            out_specs=pl.BlockSpec((TB, C), lambda i: (i, 0)),   # unpadded C
        ),
        compiler_params=pltpu.CompilerParams(
            dimension_semantics=("parallel",),  # megacore-shard the batch axis
        ),
    )(x, w1p, b1p, w2p, b2p)

    return out


def init_params(key, n_feature, n_output, hidden=50):
    """Deterministic init mimicking torch.nn.Linear defaults
    (uniform in [-1/sqrt(fan_in), 1/sqrt(fan_in)])."""
    k1, k2, k3, k4 = jax.random.split(key, 4)
    lim1 = 1.0 / jnp.sqrt(jnp.float32(n_feature))
    lim2 = 1.0 / jnp.sqrt(jnp.float32(hidden))
    w1 = jax.random.uniform(k1, (n_feature, hidden), jnp.float32, -lim1, lim1)
    b1 = jax.random.uniform(k2, (1, hidden), jnp.float32, -lim1, lim1)
    w2 = jax.random.uniform(k3, (hidden, n_output), jnp.float32, -lim2, lim2)
    b2 = jax.random.uniform(k4, (1, n_output), jnp.float32, -lim2, lim2)
    return w1, b1, w2, b2


def reference_forward(x, w1, b1, w2, b2):
    h = jnp.maximum(
        jnp.dot(x, w1, precision=lax.Precision.HIGHEST) + b1, 0.0)
    logits = jnp.dot(h, w2, precision=lax.Precision.HIGHEST) + b2
    return jax.nn.softmax(logits, axis=1)


if __name__ == "__main__":
    key = jax.random.PRNGKey(0)
    kx, kx2, kp = jax.random.split(key, 3)

    n_feature, n_output = 32, 10
    w1, b1, w2, b2 = init_params(kp, n_feature, n_output)

    # 1) Small batch, f32 path — exact semantics vs reference.
    B = 8
    x = jax.random.normal(kx, (B, n_feature), dtype=jnp.float32)
    out = jax.block_until_ready(bpnet_forward(x, w1, b1, w2, b2))
    ref = reference_forward(x, w1, b1, w2, b2)
    assert out.shape == (B, n_output)
    assert jnp.allclose(out, ref, atol=1e-5, rtol=1e-5)
    assert jnp.allclose(jnp.sum(out, axis=1), 1.0, atol=1e-5)

    # 2) Larger, non-multiple-of-tile batch — exercises the ragged last block,
    #    balanced multi-step grid, and the "parallel" (megacore) axis.
    B2 = 1000
    x2 = jax.random.normal(kx2, (B2, n_feature), dtype=jnp.float32)
    out2 = jax.block_until_ready(
        bpnet_forward(x2, w1, b1, w2, b2, block_batch=512))
    ref2 = reference_forward(x2, w1, b1, w2, b2)
    assert out2.shape == (B2, n_output)
    assert jnp.allclose(out2, ref2, atol=1e-5, rtol=1e-5)

    # 3) bf16 MXU-operand path (bandwidth lever) — looser tolerance.
    out_bf16 = jax.block_until_ready(
        bpnet_forward(x, w1, b1, w2, b2, use_bf16=True))
    assert jnp.allclose(out_bf16, ref, atol=2e-2, rtol=2e-2)
    assert jnp.allclose(jnp.sum(out_bf16, axis=1), 1.0, atol=1e-3)

    print("KERNEL_OK")
</pallas_src>

<mosaic_0001>
module attributes {stable_mosaic.version = 11 : i64} {
  func.func @_bpnet_kernel(%arg0: i32, %arg1: memref<8x32xf32, #tpu.memory_space<vmem>>, %arg2: memref<32x128xf32, #tpu.memory_space<vmem>>, %arg3: memref<1x128xf32, #tpu.memory_space<vmem>>, %arg4: memref<128x128xf32, #tpu.memory_space<vmem>>, %arg5: memref<1x128xf32, #tpu.memory_space<vmem>>, %arg6: memref<8x10xf32, #tpu.memory_space<vmem>>) attributes {dimension_semantics = [#tpu.dimension_semantics<parallel>], iteration_bounds = array<i64: 1>, scalar_prefetch = 0 : i64, scratch_operands = 0 : i64, tpu.core_type = #tpu.core_type<tc>, window_params = [{transform_indices = @transform_0, window_bounds = array<i64: 8, 32>}, {pipeline_mode = #tpu.pipeline_mode<synchronous>, transform_indices = @transform_1, window_bounds = array<i64: 32, 128>}, {pipeline_mode = #tpu.pipeline_mode<synchronous>, transform_indices = @transform_2, window_bounds = array<i64: 1, 128>}, {pipeline_mode = #tpu.pipeline_mode<synchronous>, transform_indices = @transform_3, window_bounds = array<i64: 128, 128>}, {pipeline_mode = #tpu.pipeline_mode<synchronous>, transform_indices = @transform_4, window_bounds = array<i64: 1, 128>}, {transform_indices = @transform_5, window_bounds = array<i64: 8, 10>}]} {
    %c0 = arith.constant 0 : index
    %c0_0 = arith.constant 0 : index
    %0 = vector.load %arg1[%c0, %c0_0] : memref<8x32xf32, #tpu.memory_space<vmem>>, vector<8x32xf32>
    %c0_1 = arith.constant 0 : index
    %c0_2 = arith.constant 0 : index
    %1 = vector.load %arg2[%c0_1, %c0_2] : memref<32x128xf32, #tpu.memory_space<vmem>>, vector<32x128xf32>
    %cst = arith.constant dense<0.000000e+00> : vector<8x128xf32>
    %2 = tpu.matmul %0, %1, %cst {dimension_numbers = #tpu.dot_dimension_numbers<[1], [0], [0], [1], [0, 0, 1, 1], [], []>, precision = #tpu.contract_precision<fp32>} : vector<8x32xf32>, vector<32x128xf32>, vector<8x128xf32> -> vector<8x128xf32>
    %c0_3 = arith.constant 0 : index
    %c0_4 = arith.constant 0 : index
    %3 = vector.load %arg3[%c0_3, %c0_4] : memref<1x128xf32, #tpu.memory_space<vmem>>, vector<1x128xf32>
    %4 = vector.broadcast %3 : vector<1x128xf32> to vector<8x128xf32>
    %5 = arith.addf %2, %4 : vector<8x128xf32>
    %cst_5 = arith.constant 0.000000e+00 : f32
    %6 = vector.broadcast %cst_5 : f32 to vector<8x128xf32>
    %7 = arith.maximumf %5, %6 : vector<8x128xf32>
    %c0_6 = arith.constant 0 : index
    %c0_7 = arith.constant 0 : index
    %8 = vector.load %arg4[%c0_6, %c0_7] : memref<128x128xf32, #tpu.memory_space<vmem>>, vector<128x128xf32>
    %cst_8 = arith.constant dense<0.000000e+00> : vector<8x128xf32>
    %9 = tpu.matmul %7, %8, %cst_8 {dimension_numbers = #tpu.dot_dimension_numbers<[1], [0], [0], [1], [0, 0, 1, 1], [], []>, precision = #tpu.contract_precision<fp32>} : vector<8x128xf32>, vector<128x128xf32>, vector<8x128xf32> -> vector<8x128xf32>
    %c0_9 = arith.constant 0 : index
    %c0_10 = arith.constant 0 : index
    %10 = vector.load %arg5[%c0_9, %c0_10] : memref<1x128xf32, #tpu.memory_space<vmem>>, vector<1x128xf32>
    %11 = vector.broadcast %10 : vector<1x128xf32> to vector<8x128xf32>
    %12 = arith.addf %9, %11 : vector<8x128xf32>
    %cst_11 = arith.constant dense<0xFF800000> : vector<8xf32>
    %13 = vector.multi_reduction <maximumf>, %12, %cst_11 [1] : vector<8x128xf32> to vector<8xf32>
    %14 = vector.shape_cast %13 : vector<8xf32> to vector<8x1xf32>
    %15 = vector.broadcast %14 : vector<8x1xf32> to vector<8x128xf32>
    %16 = arith.subf %12, %15 : vector<8x128xf32>
    %17 = math.exp %16 : vector<8x128xf32>
    %cst_12 = arith.constant dense<0.000000e+00> : vector<8xf32>
    %18 = vector.multi_reduction <add>, %17, %cst_12 [1] : vector<8x128xf32> to vector<8xf32>
    %19 = vector.shape_cast %18 : vector<8xf32> to vector<8x1xf32>
    %20 = tpu.reciprocal %19 : vector<8x1xf32> -> vector<8x1xf32>
    %21 = vector.broadcast %20 : vector<8x1xf32> to vector<8x128xf32>
    %22 = arith.mulf %17, %21 : vector<8x128xf32>
    %23 = vector.extract_strided_slice %22 {offsets = [0, 0], sizes = [8, 10], strides = [1, 1]} : vector<8x128xf32> to vector<8x10xf32>
    %c0_13 = arith.constant 0 : index
    %c0_14 = arith.constant 0 : index
    %24 = vector.load %arg6[%c0_13, %c0_14] : memref<8x10xf32, #tpu.memory_space<vmem>>, vector<8x10xf32>
    tpu.vector_store %arg6[%c0_13, %c0_14], %23 {strides = array<i32>} : memref<8x10xf32, #tpu.memory_space<vmem>>, vector<8x10xf32>,
    return
  }
  func.func @transform_0(%arg0: i32) -> (i32, i32) {
    %c0_i32 = arith.constant 0 : i32
    %c0_i32_0 = arith.constant 0 : i32
    return %arg0, %c0_i32 : i32, i32
  }
  func.func @transform_1(%arg0: i32) -> (i32, i32) {
    %c0_i32 = arith.constant 0 : i32
    %c0_i32_0 = arith.constant 0 : i32
    %c0_i32_1 = arith.constant 0 : i32
    return %c0_i32, %c0_i32_0 : i32, i32
  }
  func.func @transform_2(%arg0: i32) -> (i32, i32) {
    %c0_i32 = arith.constant 0 : i32
    %c0_i32_0 = arith.constant 0 : i32
    %c0_i32_1 = arith.constant 0 : i32
    return %c0_i32, %c0_i32_0 : i32, i32
  }
  func.func @transform_3(%arg0: i32) -> (i32, i32) {
    %c0_i32 = arith.constant 0 : i32
    %c0_i32_0 = arith.constant 0 : i32
    %c0_i32_1 = arith.constant 0 : i32
    return %c0_i32, %c0_i32_0 : i32, i32
  }
  func.func @transform_4(%arg0: i32) -> (i32, i32) {
    %c0_i32 = arith.constant 0 : i32
    %c0_i32_0 = arith.constant 0 : i32
    %c0_i32_1 = arith.constant 0 : i32
    return %c0_i32, %c0_i32_0 : i32, i32
  }
  func.func @transform_5(%arg0: i32) -> (i32, i32) {
    %c0_i32 = arith.constant 0 : i32
    %c0_i32_0 = arith.constant 0 : i32
    return %arg0, %c0_i32 : i32, i32
  }
}

</mosaic_0001>

<llo_original>
// kernel: tpu_custom_call.1
$region0: #{tpu_custom_call.1}
  #allocation0 [shape = 'u32[]', space=smem, size = 0x4, offset = 0x4, fixed_abs, tag = 'smem constant byte address 0x4 - core index']
  #allocation1 [shape = 'u32[144,128]{1,0:T(1,128)}', space=vmem, size = 0x12000, scoped, tag = 'internal scratch']
  %s0 = inlined_call_operand.hbm [shape: f32[8,32], index: 0, kind: input, shape index: {}]
  %s1 = inlined_call_operand.hbm [shape: f32[32,128], index: 1, kind: input, shape index: {}]
  %s2 = inlined_call_operand.vmem [shape: f32[1,128], index: 2, kind: input, shape index: {}]
  %s3 = inlined_call_operand.hbm [shape: f32[128,128], index: 3, kind: input, shape index: {}]
  %s4 = inlined_call_operand.vmem [shape: f32[1,128], index: 4, kind: input, shape index: {}]
  %s5 = inlined_call_operand.hbm [shape: f32[8,10], index: 5, kind: output, shape index: {}]
  %s6 = sld [smem:[#allocation0]]
  $region42: #{tpu_custom_call.1} parent=0
    _
  %s8 = ssub.s32 1, %s6
  %s9 = scalar_select 0, %s8, %s6
  $region1: #{tpu_custom_call.1} parent=0
    #allocation2 [shape = 'u8[4096]{0}', space=vmem, size = 0x1000, scoped, tag = 'input window, operand 0, single buffered']
    #allocation3 [shape = 's32[1]{0}', space=sflag, size = 0x4, scoped, tag = 'scoped memory for tpu_custom_call.1']
    #allocation4 [shape = 's32[1]{0}', space=sflag, size = 0x4, scoped, tag = 'scoped memory for tpu_custom_call.1']
    #allocation5 [shape = 'u8[16384]{0}', space=vmem, size = 0x4000, scoped, tag = 'input window, operand 1, single buffered']
    #allocation6 [shape = 's32[1]{0}', space=sflag, size = 0x4, scoped, tag = 'scoped memory for tpu_custom_call.1']
    #allocation7 [shape = 'u8[65536]{0}', space=vmem, size = 0x10000, scoped, tag = 'input window, operand 3, single buffered']
    #allocation8 [shape = 'u8[4096]{0}', space=vmem, size = 0x1000, scoped, tag = 'output window, operand 0, single buffered']
    %10 = vsyncpa [#allocation3], 0
    %11 = vsyncpa [#allocation6], 0
    %12 = vsyncpa [#allocation4], 0
    // Predicated region
    $region2: #{tpu_custom_call.1} parent=1 // pred_check
      _
    $region3: #{tpu_custom_call.1} parent=1 // pred_check_branch
      %14 = sbr.rel (0) target = $region5
    $region4: #{tpu_custom_call.1} parent=1 // pred_region
      %s16 = ssub.s32 128, 128
      %17 = vsyncadd [#allocation3], %s16
      %s19 = sshll.u32 [#allocation2], 4
      %s20 = int_to_ptr.vmem [resolvable:$true] %s19
      %22 = dma.hbm_to_vmem [thread:$0]  %s0, 128, %s20, [#allocation3]
    $region5: #{tpu_custom_call.1} parent=1 // pred_fallthru
      _
    // Predicated region
    $region6: #{tpu_custom_call.1} parent=1 // pred_check
      _
    $region7: #{tpu_custom_call.1} parent=1 // pred_check_branch
      %24 = sbr.rel (0) target = $region9
    $region8: #{tpu_custom_call.1} parent=1 // pred_region
      %s26 = ssub.s32 512, 512
      %27 = vsyncadd [#allocation6], %s26
      %s28 = sshll.u32 [#allocation5], 4
      %s29 = int_to_ptr.vmem [resolvable:$true] %s28
      %34 = dma.hbm_to_vmem [thread:$0]  %s1, 512, %s29, [#allocation6], 128, 128, 8
    $region9: #{tpu_custom_call.1} parent=1 // pred_fallthru
      _
    // Predicated region
    $region10: #{tpu_custom_call.1} parent=1 // pred_check
      _
    $region11: #{tpu_custom_call.1} parent=1 // pred_check_branch
      %36 = sbr.rel (0) target = $region13
    $region12: #{tpu_custom_call.1} parent=1 // pred_region
      _
    $region13: #{tpu_custom_call.1} parent=1 // pred_fallthru
      _
    // Predicated region
    $region14: #{tpu_custom_call.1} parent=1 // pred_check
      _
    $region15: #{tpu_custom_call.1} parent=1 // pred_check_branch
      %38 = sbr.rel (0) target = $region17
    $region16: #{tpu_custom_call.1} parent=1 // pred_region
      %s40 = ssub.s32 2048, 2048
      %41 = vsyncadd [#allocation6], %s40
      %s42 = sshll.u32 [#allocation7], 4
      %s43 = int_to_ptr.vmem [resolvable:$true] %s42
      %48 = dma.hbm_to_vmem [thread:$0]  %s3, 2048, %s43, [#allocation6], 128, 128, 8
    $region17: #{tpu_custom_call.1} parent=1 // pred_fallthru
      _
    // Predicated region
    $region18: #{tpu_custom_call.1} parent=1 // pred_check
      _
    $region19: #{tpu_custom_call.1} parent=1 // pred_check_branch
      %50 = sbr.rel (0) target = $region21
    $region20: #{tpu_custom_call.1} parent=1 // pred_region
      _
    $region21: #{tpu_custom_call.1} parent=1 // pred_fallthru
      _
    // Predicated region
    $region22: #{tpu_custom_call.1} parent=1 // pred_check
      _
    $region23: #{tpu_custom_call.1} parent=1 // pred_check_branch
      %52 = sbr.rel (0) target = $region25
    $region24: #{tpu_custom_call.1} parent=1 // pred_region
      %53 = dma.done [#allocation3], 128
    $region25: #{tpu_custom_call.1} parent=1 // pred_fallthru
      _
    // Predicated region
    $region26: #{tpu_custom_call.1} parent=1 // pred_check
      _
    $region27: #{tpu_custom_call.1} parent=1 // pred_check_branch
      %55 = sbr.rel (0) target = $region29
    $region28: #{tpu_custom_call.1} parent=1 // pred_region
      %56 = dma.done [#allocation6], 512
    $region29: #{tpu_custom_call.1} parent=1 // pred_fallthru
      _
    // Predicated region
    $region30: #{tpu_custom_call.1} parent=1 // pred_check
      _
    $region31: #{tpu_custom_call.1} parent=1 // pred_check_branch
      %58 = sbr.rel (0) target = $region33
    $region32: #{tpu_custom_call.1} parent=1 // pred_region
      %59 = dma.done [#allocation6], 2048
    $region33: #{tpu_custom_call.1} parent=1 // pred_fallthru
      _
    %v60 = vld [vmem:[#allocation2] sm:$0xff]
    %v61 = vld [vmem:[#allocation5] sm:$0xff]
    %v62 = vld [vmem:[#allocation5 + $0x8] sm:$0xff]
    %v63 = vld [vmem:[#allocation5 + $0x10] sm:$0xff]
    %v64 = vld [vmem:[#allocation5 + $0x18] sm:$0xff]
    %v65 = vld [vmem:[%s2] sm:$0x1]
    %v67 = vlaneseq
    %v68 = vshrl.u32 %v67, 7
    %v69 = vsub.s32 0, %v68
    %v70 = vrot.slane %v65, %v69
    %vm72 = vcmask 261120
    %v74 = vsel %vm72, %v60, 0
    %76 = vmatprep.subr.mxu0 0.0
    %v77 = vand.u32 %v61, 4294901760
    %78 = vmatpush1.msra.mxu0 %v77
    %79 = vmatprep.subr.mxu0 0.0
    %v80 = vand.u32 %v62, 4294901760
    %81 = vmatpush1.msra.mxu0 %v80
    %82 = vmatprep.subr.mxu0 0.0
    %v83 = vand.u32 %v63, 4294901760
    %84 = vmatpush1.msra.mxu0 %v83
    %85 = vmatprep.subr.mxu0 0.0
    %v86 = vand.u32 %v64, 4294901760
    %87 = vmatpush1.msra.mxu0 %v86
    %88 = vmatprep.subr.mxu0 0.0
    %89 = vmatpush1.msra.mxu0 0.0
    %90 = vmatprep.subr.mxu0 0.0
    %91 = vmatpush1.msra.mxu0 0.0
    %92 = vmatprep.subr.mxu0 0.0
    %93 = vmatpush1.msra.mxu0 0.0
    %94 = vmatprep.subr.mxu0 0.0
    %95 = vmatpush1.msra.mxu0 0.0
    %96 = vmatprep.subr.mxu0 0.0
    %97 = vmatpush1.msra.mxu0 0.0
    %98 = vmatprep.subr.mxu0 0.0
    %99 = vmatpush1.msra.mxu0 0.0
    %100 = vmatprep.subr.mxu0 0.0
    %101 = vmatpush1.msra.mxu0 0.0
    %102 = vmatprep.subr.mxu0 0.0
    %103 = vmatpush1.msra.mxu0 0.0
    %104 = vmatprep.subr.mxu0 0.0
    %105 = vmatpush1.msra.mxu0 0.0
    %106 = vmatprep.subr.mxu0 0.0
    %107 = vmatpush1.msra.mxu0 0.0
    %108 = vmatprep.subr.mxu0 0.0
    %109 = vmatpush1.msra.mxu0 0.0
    %110 = vmatprep.subr.mxu0 0.0
    %111 = vmatpush1.msra.mxu0 0.0
    %112 = vmatprep.subr.mxu0 0.0
    %113 = vmatpush1.msra.mxu0 0.0
    %114 = vmatprep.subr.mxu0 0.0
    %115 = vmatpush1.msra.mxu0 0.0
    %116 = vmatprep.subr.mxu0 0.0
    %117 = vmatpush1.msra.mxu0 0.0
    %118 = vmatprep.subr.mxu0 0.0
    %119 = vmatpush1.msra.mxu0 0.0
    %120 = vmatprep.subr.mxu0 0.0
    %121 = vmatpush1.msra.mxu0 0.0
    %122 = vmatprep.subr.mxu0 0.0
    %123 = vmatpush1.msra.mxu0 0.0
    %124 = vmatprep.subr.mxu0 0.0
    %125 = vmatpush1.msra.mxu0 0.0
    %126 = vmatprep.subr.mxu0 0.0
    %127 = vmatpush1.msra.mxu0 0.0
    %128 = vmatprep.subr.mxu0 0.0
    %129 = vmatpush1.msra.mxu0 0.0
    %130 = vmatprep.subr.mxu0 0.0
    %131 = vmatpush1.msra.mxu0 0.0
    %132 = vmatprep.subr.mxu0 0.0
    %133 = vmatpush1.msra.mxu0 0.0
    %134 = vmatprep.subr.mxu0 0.0
    %135 = vmatpush1.msra.mxu0 0.0
    %136 = vmatprep.subr.mxu0 0.0
    %137 = vmatpush1.msra.mxu0 0.0
    %138 = vmatprep.subr.mxu0 0.0
    %139 = vmatpush1.msra.mxu0 0.0
    %140 = vmatprep.subr.mxu0 0.0
    %141 = vmatpush1.msra.mxu0 0.0
    %142 = vmatprep.subr.mxu0 0.0
    %143 = vmatpush1.msra.mxu0 0.0
    %144 = vmatprep.mubr.f32.mxu0 0.0
    %v145 = vand.u32 %v74, 4294901760
    %v146 = vsub.f32 %v74, %v145
    %v147 = vand.u32 %v146, 4294901760
    %v148 = vsub.f32 %v146, %v147
    %v149 = vand.u32 %v148, 4294901760
    %150 = vmatmul.mubr.f32.gmra.mrb[0].mxu0 %v149
    %v151 = vpop.f32.mrb[0].mxu0
    %v152 = vadd.f32 %v70, %v151
    %v153 = vpop.f32.mrb[0].mxu0
    %154 = vdwg.mxu0
    %155 = vmatprep.subr.mxu0 0.0
    %v156 = vand.u32 %v61, 4294901760
    %v157 = vsub.f32 %v61, %v156
    %v158 = vand.u32 %v157, 4294901760
    %v159 = vsub.f32 %v157, %v158
    %v160 = vand.u32 %v159, 4294901760
    %161 = vmatpush1.msra.mxu0 %v160
    %162 = vmatprep.subr.mxu0 0.0
    %v163 = vand.u32 %v62, 4294901760
    %v164 = vsub.f32 %v62, %v163
    %v165 = vand.u32 %v164, 4294901760
    %v166 = vsub.f32 %v164, %v165
    %v167 = vand.u32 %v166, 4294901760
    %168 = vmatpush1.msra.mxu0 %v167
    %169 = vmatprep.subr.mxu0 0.0
    %v170 = vand.u32 %v63, 4294901760
    %v171 = vsub.f32 %v63, %v170
    %v172 = vand.u32 %v171, 4294901760
    %v173 = vsub.f32 %v171, %v172
    %v174 = vand.u32 %v173, 4294901760
    %175 = vmatpush1.msra.mxu0 %v174
    %176 = vmatprep.subr.mxu0 0.0
    %v177 = vand.u32 %v64, 4294901760
    %v178 = vsub.f32 %v64, %v177
    %v179 = vand.u32 %v178, 4294901760
    %v180 = vsub.f32 %v178, %v179
    %v181 = vand.u32 %v180, 4294901760
    %182 = vmatpush1.msra.mxu0 %v181
    %183 = vmatprep.subr.mxu0 0.0
    %184 = vmatpush1.msra.mxu0 0.0
    %185 = vmatprep.subr.mxu0 0.0
    %186 = vmatpush1.msra.mxu0 0.0
    %187 = vmatprep.subr.mxu0 0.0
    %188 = vmatpush1.msra.mxu0 0.0
    %189 = vmatprep.subr.mxu0 0.0
    %190 = vmatpush1.msra.mxu0 0.0
    %191 = vmatprep.subr.mxu0 0.0
    %192 = vmatpush1.msra.mxu0 0.0
    %193 = vmatprep.subr.mxu0 0.0
    %194 = vmatpush1.msra.mxu0 0.0
    %195 = vmatprep.subr.mxu0 0.0
    %196 = vmatpush1.msra.mxu0 0.0
    %197 = vmatprep.subr.mxu0 0.0
    %198 = vmatpush1.msra.mxu0 0.0
    %199 = vmatprep.subr.mxu0 0.0
    %200 = vmatpush1.msra.mxu0 0.0
    %201 = vmatprep.subr.mxu0 0.0
    %202 = vmatpush1.msra.mxu0 0.0
    %203 = vmatprep.subr.mxu0 0.0
    %204 = vmatpush1.msra.mxu0 0.0
    %205 = vmatprep.subr.mxu0 0.0
    %206 = vmatpush1.msra.mxu0 0.0
    %207 = vmatprep.subr.mxu0 0.0
    %208 = vmatpush1.msra.mxu0 0.0
    %209 = vmatprep.subr.mxu0 0.0
    %210 = vmatpush1.msra.mxu0 0.0
    %211 = vmatprep.subr.mxu0 0.0
    %212 = vmatpush1.msra.mxu0 0.0
    %213 = vmatprep.subr.mxu0 0.0
    %214 = vmatpush1.msra.mxu0 0.0
    %215 = vmatprep.subr.mxu0 0.0
    %216 = vmatpush1.msra.mxu0 0.0
    %217 = vmatprep.subr.mxu0 0.0
    %218 = vmatpush1.msra.mxu0 0.0
    %219 = vmatprep.subr.mxu0 0.0
    %220 = vmatpush1.msra.mxu0 0.0
    %221 = vmatprep.subr.mxu0 0.0
    %222 = vmatpush1.msra.mxu0 0.0
    %223 = vmatprep.subr.mxu0 0.0
    %224 = vmatpush1.msra.mxu0 0.0
    %225 = vmatprep.subr.mxu0 0.0
    %226 = vmatpush1.msra.mxu0 0.0
    %227 = vmatprep.subr.mxu0 0.0
    %228 = vmatpush1.msra.mxu0 0.0
    %229 = vmatprep.subr.mxu0 0.0
    %230 = vmatpush1.msra.mxu0 0.0
    %231 = vmatprep.subr.mxu0 0.0
    %232 = vmatpush1.msra.mxu0 0.0
    %233 = vmatprep.subr.mxu0 0.0
    %234 = vmatpush1.msra.mxu0 0.0
    %235 = vmatprep.subr.mxu0 0.0
    %236 = vmatpush1.msra.mxu0 0.0
    %237 = vmatprep.subr.mxu0 0.0
    %238 = vmatpush1.msra.mxu0 0.0
    %239 = vmatprep.mubr.f32.mxu0 0.0
    %v240 = vand.u32 %v74, 4294901760
    %241 = vmatmul.mubr.f32.gmra.mrb[0].mxu0 %v240
    %v242 = vpop.f32.mrb[0].mxu0
    %v243 = vadd.f32 %v152, %v242
    %v244 = vpop.f32.mrb[0].mxu0
    %245 = vdwg.mxu0
    %246 = vmatprep.subr.mxu0 0.0
    %v247 = vand.u32 %v61, 4294901760
    %v248 = vsub.f32 %v61, %v247
    %249 = vmatpush1.msra.mxu0 %v248
    %250 = vmatprep.subr.mxu0 0.0
    %v251 = vand.u32 %v62, 4294901760
    %v252 = vsub.f32 %v62, %v251
    %253 = vmatpush1.msra.mxu0 %v252
    %254 = vmatprep.subr.mxu0 0.0
    %v255 = vand.u32 %v63, 4294901760
    %v256 = vsub.f32 %v63, %v255
    %257 = vmatpush1.msra.mxu0 %v256
    %258 = vmatprep.subr.mxu0 0.0
    %v259 = vand.u32 %v64, 4294901760
    %v260 = vsub.f32 %v64, %v259
    %261 = vmatpush1.msra.mxu0 %v260
    %262 = vmatprep.subr.mxu0 0.0
    %263 = vmatpush1.msra.mxu0 0.0
    %264 = vmatprep.subr.mxu0 0.0
    %265 = vmatpush1.msra.mxu0 0.0
    %266 = vmatprep.subr.mxu0 0.0
    %267 = vmatpush1.msra.mxu0 0.0
    %268 = vmatprep.subr.mxu0 0.0
    %269 = vmatpush1.msra.mxu0 0.0
    %270 = vmatprep.subr.mxu0 0.0
    %271 = vmatpush1.msra.mxu0 0.0
    %272 = vmatprep.subr.mxu0 0.0
    %273 = vmatpush1.msra.mxu0 0.0
    %274 = vmatprep.subr.mxu0 0.0
    %275 = vmatpush1.msra.mxu0 0.0
    %276 = vmatprep.subr.mxu0 0.0
    %277 = vmatpush1.msra.mxu0 0.0
    %278 = vmatprep.subr.mxu0 0.0
    %279 = vmatpush1.msra.mxu0 0.0
    %280 = vmatprep.subr.mxu0 0.0
    %281 = vmatpush1.msra.mxu0 0.0
    %282 = vmatprep.subr.mxu0 0.0
    %283 = vmatpush1.msra.mxu0 0.0
    %284 = vmatprep.subr.mxu0 0.0
    %285 = vmatpush1.msra.mxu0 0.0
    %286 = vmatprep.subr.mxu0 0.0
    %287 = vmatpush1.msra.mxu0 0.0
    %288 = vmatprep.subr.mxu0 0.0
    %289 = vmatpush1.msra.mxu0 0.0
    %290 = vmatprep.subr.mxu0 0.0
    %291 = vmatpush1.msra.mxu0 0.0
    %292 = vmatprep.subr.mxu0 0.0
    %293 = vmatpush1.msra.mxu0 0.0
    %294 = vmatprep.subr.mxu0 0.0
    %295 = vmatpush1.msra.mxu0 0.0
    %296 = vmatprep.subr.mxu0 0.0
    %297 = vmatpush1.msra.mxu0 0.0
    %298 = vmatprep.subr.mxu0 0.0
    %299 = vmatpush1.msra.mxu0 0.0
    %300 = vmatprep.subr.mxu0 0.0
    %301 = vmatpush1.msra.mxu0 0.0
    %302 = vmatprep.subr.mxu0 0.0
    %303 = vmatpush1.msra.mxu0 0.0
    %304 = vmatprep.subr.mxu0 0.0
    %305 = vmatpush1.msra.mxu0 0.0
    %306 = vmatprep.subr.mxu0 0.0
    %307 = vmatpush1.msra.mxu0 0.0
    %308 = vmatprep.subr.mxu0 0.0
    %309 = vmatpush1.msra.mxu0 0.0
    %310 = vmatprep.subr.mxu0 0.0
    %311 = vmatpush1.msra.mxu0 0.0
    %312 = vmatprep.subr.mxu0 0.0
    %313 = vmatpush1.msra.mxu0 0.0
    %314 = vmatprep.subr.mxu0 0.0
    %315 = vmatpush1.msra.mxu0 0.0
    %316 = vmatprep.subr.mxu0 0.0
    %317 = vmatpush1.msra.mxu0 0.0
    %318 = vmatprep.mubr.f32.mxu0 0.0
    %v319 = vand.u32 %v74, 4294901760
    %v320 = vsub.f32 %v74, %v319
    %321 = vmatmul.mubr.f32.gmra.mrb[0].mxu0 %v320
    %v322 = vpop.f32.mrb[0].mxu0
    %v323 = vadd.f32 %v243, %v322
    %v324 = vpop.f32.mrb[0].mxu0
    %325 = vdwg.mxu0
    %326 = vmatprep.subr.mxu0 0.0
    %v327 = vand.u32 %v61, 4294901760
    %328 = vmatpush1.msra.mxu0 %v327
    %329 = vmatprep.subr.mxu0 0.0
    %v330 = vand.u32 %v62, 4294901760
    %331 = vmatpush1.msra.mxu0 %v330
    %332 = vmatprep.subr.mxu0 0.0
    %v333 = vand.u32 %v63, 4294901760
    %334 = vmatpush1.msra.mxu0 %v333
    %335 = vmatprep.subr.mxu0 0.0
    %v336 = vand.u32 %v64, 4294901760
    %337 = vmatpush1.msra.mxu0 %v336
    %338 = vmatprep.subr.mxu0 0.0
    %339 = vmatpush1.msra.mxu0 0.0
    %340 = vmatprep.subr.mxu0 0.0
    %341 = vmatpush1.msra.mxu0 0.0
    %342 = vmatprep.subr.mxu0 0.0
    %343 = vmatpush1.msra.mxu0 0.0
    %344 = vmatprep.subr.mxu0 0.0
    %345 = vmatpush1.msra.mxu0 0.0
    %346 = vmatprep.subr.mxu0 0.0
    %347 = vmatpush1.msra.mxu0 0.0
    %348 = vmatprep.subr.mxu0 0.0
    %349 = vmatpush1.msra.mxu0 0.0
    %350 = vmatprep.subr.mxu0 0.0
    %351 = vmatpush1.msra.mxu0 0.0
    %352 = vmatprep.subr.mxu0 0.0
    %353 = vmatpush1.msra.mxu0 0.0
    %354 = vmatprep.subr.mxu0 0.0
    %355 = vmatpush1.msra.mxu0 0.0
    %356 = vmatprep.subr.mxu0 0.0
    %357 = vmatpush1.msra.mxu0 0.0
    %358 = vmatprep.subr.mxu0 0.0
    %359 = vmatpush1.msra.mxu0 0.0
    %360 = vmatprep.subr.mxu0 0.0
    %361 = vmatpush1.msra.mxu0 0.0
    %362 = vmatprep.subr.mxu0 0.0
    %363 = vmatpush1.msra.mxu0 0.0
    %364 = vmatprep.subr.mxu0 0.0
    %365 = vmatpush1.msra.mxu0 0.0
    %366 = vmatprep.subr.mxu0 0.0
    %367 = vmatpush1.msra.mxu0 0.0
    %368 = vmatprep.subr.mxu0 0.0
    %369 = vmatpush1.msra.mxu0 0.0
    %370 = vmatprep.subr.mxu0 0.0
    %371 = vmatpush1.msra.mxu0 0.0
    %372 = vmatprep.subr.mxu0 0.0
    %373 = vmatpush1.msra.mxu0 0.0
    %374 = vmatprep.subr.mxu0 0.0
    %375 = vmatpush1.msra.mxu0 0.0
    %376 = vmatprep.subr.mxu0 0.0
    %377 = vmatpush1.msra.mxu0 0.0
    %378 = vmatprep.subr.mxu0 0.0
    %379 = vmatpush1.msra.mxu0 0.0
    %380 = vmatprep.subr.mxu0 0.0
    %381 = vmatpush1.msra.mxu0 0.0
    %382 = vmatprep.subr.mxu0 0.0
    %383 = vmatpush1.msra.mxu0 0.0
    %384 = vmatprep.subr.mxu0 0.0
    %385 = vmatpush1.msra.mxu0 0.0
    %386 = vmatprep.subr.mxu0 0.0
    %387 = vmatpush1.msra.mxu0 0.0
    %388 = vmatprep.subr.mxu0 0.0
    %389 = vmatpush1.msra.mxu0 0.0
    %390 = vmatprep.subr.mxu0 0.0
    %391 = vmatpush1.msra.mxu0 0.0
    %392 = vmatprep.subr.mxu0 0.0
    %393 = vmatpush1.msra.mxu0 0.0
    %394 = vmatprep.mubr.f32.mxu0 0.0
    %v395 = vand.u32 %v74, 4294901760
    %v396 = vsub.f32 %v74, %v395
    %v397 = vand.u32 %v396, 4294901760
    %398 = vmatmul.mubr.f32.gmra.mrb[0].mxu0 %v397
    %v399 = vpop.f32.mrb[0].mxu0
    %v400 = vadd.f32 %v323, %v399
    %v401 = vpop.f32.mrb[0].mxu0
    %402 = vdwg.mxu0
    %403 = vmatprep.subr.mxu0 0.0
    %v404 = vand.u32 %v61, 4294901760
    %v405 = vsub.f32 %v61, %v404
    %v406 = vand.u32 %v405, 4294901760
    %407 = vmatpush1.msra.mxu0 %v406
    %408 = vmatprep.subr.mxu0 0.0
    %v409 = vand.u32 %v62, 4294901760
    %v410 = vsub.f32 %v62, %v409
    %v411 = vand.u32 %v410, 4294901760
    %412 = vmatpush1.msra.mxu0 %v411
    %413 = vmatprep.subr.mxu0 0.0
    %v414 = vand.u32 %v63, 4294901760
    %v415 = vsub.f32 %v63, %v414
    %v416 = vand.u32 %v415, 4294901760
    %417 = vmatpush1.msra.mxu0 %v416
    %418 = vmatprep.subr.mxu0 0.0
    %v419 = vand.u32 %v64, 4294901760
    %v420 = vsub.f32 %v64, %v419
    %v421 = vand.u32 %v420, 4294901760
    %422 = vmatpush1.msra.mxu0 %v421
    %423 = vmatprep.subr.mxu0 0.0
    %424 = vmatpush1.msra.mxu0 0.0
    %425 = vmatprep.subr.mxu0 0.0
    %426 = vmatpush1.msra.mxu0 0.0
    %427 = vmatprep.subr.mxu0 0.0
    %428 = vmatpush1.msra.mxu0 0.0
    %429 = vmatprep.subr.mxu0 0.0
    %430 = vmatpush1.msra.mxu0 0.0
    %431 = vmatprep.subr.mxu0 0.0
    %432 = vmatpush1.msra.mxu0 0.0
    %433 = vmatprep.subr.mxu0 0.0
    %434 = vmatpush1.msra.mxu0 0.0
    %435 = vmatprep.subr.mxu0 0.0
    %436 = vmatpush1.msra.mxu0 0.0
    %437 = vmatprep.subr.mxu0 0.0
    %438 = vmatpush1.msra.mxu0 0.0
    %439 = vmatprep.subr.mxu0 0.0
    %440 = vmatpush1.msra.mxu0 0.0
    %441 = vmatprep.subr.mxu0 0.0
    %442 = vmatpush1.msra.mxu0 0.0
    %443 = vmatprep.subr.mxu0 0.0
    %444 = vmatpush1.msra.mxu0 0.0
    %445 = vmatprep.subr.mxu0 0.0
    %446 = vmatpush1.msra.mxu0 0.0
    %447 = vmatprep.subr.mxu0 0.0
    %448 = vmatpush1.msra.mxu0 0.0
    %449 = vmatprep.subr.mxu0 0.0
    %450 = vmatpush1.msra.mxu0 0.0
    %451 = vmatprep.subr.mxu0 0.0
    %452 = vmatpush1.msra.mxu0 0.0
    %453 = vmatprep.subr.mxu0 0.0
    %454 = vmatpush1.msra.mxu0 0.0
    %455 = vmatprep.subr.mxu0 0.0
    %456 = vmatpush1.msra.mxu0 0.0
    %457 = vmatprep.subr.mxu0 0.0
    %458 = vmatpush1.msra.mxu0 0.0
    %459 = vmatprep.subr.mxu0 0.0
    %460 = vmatpush1.msra.mxu0 0.0
    %461 = vmatprep.subr.mxu0 0.0
    %462 = vmatpush1.msra.mxu0 0.0
    %463 = vmatprep.subr.mxu0 0.0
    %464 = vmatpush1.msra.mxu0 0.0
    %465 = vmatprep.subr.mxu0 0.0
    %466 = vmatpush1.msra.mxu0 0.0
    %467 = vmatprep.subr.mxu0 0.0
    %468 = vmatpush1.msra.mxu0 0.0
    %469 = vmatprep.subr.mxu0 0.0
    %470 = vmatpush1.msra.mxu0 0.0
    %471 = vmatprep.subr.mxu0 0.0
    %472 = vmatpush1.msra.mxu0 0.0
    %473 = vmatprep.subr.mxu0 0.0
    %474 = vmatpush1.msra.mxu0 0.0
    %475 = vmatprep.subr.mxu0 0.0
    %476 = vmatpush1.msra.mxu0 0.0
    %477 = vmatprep.subr.mxu0 0.0
    %478 = vmatpush1.msra.mxu0 0.0
    %479 = vmatprep.mubr.f32.mxu0 0.0
    %v480 = vand.u32 %v74, 4294901760
    %481 = vmatmul.mubr.f32.gmra.mrb[0].mxu0 %v480
    %v482 = vpop.f32.mrb[0].mxu0
    %v483 = vadd.f32 %v400, %v482
    %v484 = vpop.f32.mrb[0].mxu0
    %485 = vdwg.mxu0
    %486 = vmatprep.subr.mxu0 0.0
    %v487 = vand.u32 %v61, 4294901760
    %488 = vmatpush1.msra.mxu0 %v487
    %489 = vmatprep.subr.mxu0 0.0
    %v490 = vand.u32 %v62, 4294901760
    %491 = vmatpush1.msra.mxu0 %v490
    %492 = vmatprep.subr.mxu0 0.0
    %v493 = vand.u32 %v63, 4294901760
    %494 = vmatpush1.msra.mxu0 %v493
    %495 = vmatprep.subr.mxu0 0.0
    %v496 = vand.u32 %v64, 4294901760
    %497 = vmatpush1.msra.mxu0 %v496
    %498 = vmatprep.subr.mxu0 0.0
    %499 = vmatpush1.msra.mxu0 0.0
    %500 = vmatprep.subr.mxu0 0.0
    %501 = vmatpush1.msra.mxu0 0.0
    %502 = vmatprep.subr.mxu0 0.0
    %503 = vmatpush1.msra.mxu0 0.0
    %504 = vmatprep.subr.mxu0 0.0
    %505 = vmatpush1.msra.mxu0 0.0
    %506 = vmatprep.subr.mxu0 0.0
    %507 = vmatpush1.msra.mxu0 0.0
    %508 = vmatprep.subr.mxu0 0.0
    %509 = vmatpush1.msra.mxu0 0.0
    %510 = vmatprep.subr.mxu0 0.0
    %511 = vmatpush1.msra.mxu0 0.0
    %512 = vmatprep.subr.mxu0 0.0
    %513 = vmatpush1.msra.mxu0 0.0
    %514 = vmatprep.subr.mxu0 0.0
    %515 = vmatpush1.msra.mxu0 0.0
    %516 = vmatprep.subr.mxu0 0.0
    %517 = vmatpush1.msra.mxu0 0.0
    %518 = vmatprep.subr.mxu0 0.0
    %519 = vmatpush1.msra.mxu0 0.0
    %520 = vmatprep.subr.mxu0 0.0
    %521 = vmatpush1.msra.mxu0 0.0
    %522 = vmatprep.subr.mxu0 0.0
    %523 = vmatpush1.msra.mxu0 0.0
    %524 = vmatprep.subr.mxu0 0.0
    %525 = vmatpush1.msra.mxu0 0.0
    %526 = vmatprep.subr.mxu0 0.0
    %527 = vmatpush1.msra.mxu0 0.0
    %528 = vmatprep.subr.mxu0 0.0
    %529 = vmatpush1.msra.mxu0 0.0
    %530 = vmatprep.subr.mxu0 0.0
    %531 = vmatpush1.msra.mxu0 0.0
    %532 = vmatprep.subr.mxu0 0.0
    %533 = vmatpush1.msra.mxu0 0.0
    %534 = vmatprep.subr.mxu0 0.0
    %535 = vmatpush1.msra.mxu0 0.0
    %536 = vmatprep.subr.mxu0 0.0
    %537 = vmatpush1.msra.mxu0 0.0
    %538 = vmatprep.subr.mxu0 0.0
    %539 = vmatpush1.msra.mxu0 0.0
    %540 = vmatprep.subr.mxu0 0.0
    %541 = vmatpush1.msra.mxu0 0.0
    %542 = vmatprep.subr.mxu0 0.0
    %543 = vmatpush1.msra.mxu0 0.0
    %544 = vmatprep.subr.mxu0 0.0
    %545 = vmatpush1.msra.mxu0 0.0
    %546 = vmatprep.subr.mxu0 0.0
    %547 = vmatpush1.msra.mxu0 0.0
    %548 = vmatprep.subr.mxu0 0.0
    %549 = vmatpush1.msra.mxu0 0.0
    %550 = vmatprep.subr.mxu0 0.0
    %551 = vmatpush1.msra.mxu0 0.0
    %552 = vmatprep.subr.mxu0 0.0
    %553 = vmatpush1.msra.mxu0 0.0
    %554 = vmatprep.mubr.f32.mxu0 0.0
    %v555 = vand.u32 %v74, 4294901760
    %556 = vmatmul.mubr.f32.gmra.mrb[0].mxu0 %v555
    %v557 = vpop.f32.mrb[0].mxu0
    %v558 = vadd.f32 %v483, %v557
    %v559 = vpop.f32.mrb[0].mxu0
    %560 = vdwg.mxu0
    %v561 = vmax.f32 %v558, 0.0
    %v562 = vld [vmem:[#allocation7] sm:$0xff]
    %v563 = vld [vmem:[#allocation7 + $0x8] sm:$0xff]
    %v564 = vld [vmem:[#allocation7 + $0x10] sm:$0xff]
    %v565 = vld [vmem:[#allocation7 + $0x18] sm:$0xff]
    %v566 = vld [vmem:[#allocation7 + $0x20] sm:$0xff]
    %v567 = vld [vmem:[#allocation7 + $0x28] sm:$0xff]
    %v568 = vld [vmem:[#allocation7 + $0x30] sm:$0xff]
    %v569 = vld [vmem:[#allocation7 + $0x38] sm:$0xff]
    %v570 = vld [vmem:[#allocation7 + $0x40] sm:$0xff]
    %v571 = vld [vmem:[#allocation7 + $0x48] sm:$0xff]
    %v572 = vld [vmem:[#allocation7 + $0x50] sm:$0xff]
    %v573 = vld [vmem:[#allocation7 + $0x58] sm:$0xff]
    %v574 = vld [vmem:[#allocation7 + $0x60] sm:$0xff]
    %v575 = vld [vmem:[#allocation7 + $0x68] sm:$0xff]
    %v576 = vld [vmem:[#allocation7 + $0x70] sm:$0xff]
    %v577 = vld [vmem:[#allocation7 + $0x78] sm:$0xff]
    %v578 = vld [vmem:[%s4] sm:$0x1]
    %v580 = vlaneseq
    %v581 = vshrl.u32 %v580, 7
    %v582 = vsub.s32 0, %v581
    %v583 = vrot.slane %v578, %v582
    %585 = vmatprep.subr.mxu0 0.0
    %v586 = vand.u32 %v562, 4294901760
    %587 = vmatpush1.msra.mxu0 %v586
    %588 = vmatprep.subr.mxu0 0.0
    %v589 = vand.u32 %v563, 4294901760
    %590 = vmatpush1.msra.mxu0 %v589
    %591 = vmatprep.subr.mxu0 0.0
    %v592 = vand.u32 %v564, 4294901760
    %593 = vmatpush1.msra.mxu0 %v592
    %594 = vmatprep.subr.mxu0 0.0
    %v595 = vand.u32 %v565, 4294901760
    %596 = vmatpush1.msra.mxu0 %v595
    %597 = vmatprep.subr.mxu0 0.0
    %v598 = vand.u32 %v566, 4294901760
    %599 = vmatpush1.msra.mxu0 %v598
    %600 = vmatprep.subr.mxu0 0.0
    %v601 = vand.u32 %v567, 4294901760
    %602 = vmatpush1.msra.mxu0 %v601
    %603 = vmatprep.subr.mxu0 0.0
    %v604 = vand.u32 %v568, 4294901760
    %605 = vmatpush1.msra.mxu0 %v604
    %606 = vmatprep.subr.mxu0 0.0
    %v607 = vand.u32 %v569, 4294901760
    %608 = vmatpush1.msra.mxu0 %v607
    %609 = vmatprep.subr.mxu0 0.0
    %v610 = vand.u32 %v570, 4294901760
    %611 = vmatpush1.msra.mxu0 %v610
    %612 = vmatprep.subr.mxu0 0.0
    %v613 = vand.u32 %v571, 4294901760
    %614 = vmatpush1.msra.mxu0 %v613
    %615 = vmatprep.subr.mxu0 0.0
    %v616 = vand.u32 %v572, 4294901760
    %617 = vmatpush1.msra.mxu0 %v616
    %618 = vmatprep.subr.mxu0 0.0
    %v619 = vand.u32 %v573, 4294901760
    %620 = vmatpush1.msra.mxu0 %v619
    %621 = vmatprep.subr.mxu0 0.0
    %v622 = vand.u32 %v574, 4294901760
    %623 = vmatpush1.msra.mxu0 %v622
    %624 = vmatprep.subr.mxu0 0.0
    %v625 = vand.u32 %v575, 4294901760
    %626 = vmatpush1.msra.mxu0 %v625
    %627 = vmatprep.subr.mxu0 0.0
    %v628 = vand.u32 %v576, 4294901760
    %629 = vmatpush1.msra.mxu0 %v628
    %630 = vmatprep.subr.mxu0 0.0
    %v631 = vand.u32 %v577, 4294901760
    %632 = vmatpush1.msra.mxu0 %v631
    %633 = vmatprep.subr.mxu0 0.0
    %634 = vmatpush1.msra.mxu0 0.0
    %635 = vmatprep.subr.mxu0 0.0
    %636 = vmatpush1.msra.mxu0 0.0
    %637 = vmatprep.subr.mxu0 0.0
    %638 = vmatpush1.msra.mxu0 0.0
    %639 = vmatprep.subr.mxu0 0.0
    %640 = vmatpush1.msra.mxu0 0.0
    %641 = vmatprep.subr.mxu0 0.0
    %642 = vmatpush1.msra.mxu0 0.0
    %643 = vmatprep.subr.mxu0 0.0
    %644 = vmatpush1.msra.mxu0 0.0
    %645 = vmatprep.subr.mxu0 0.0
    %646 = vmatpush1.msra.mxu0 0.0
    %647 = vmatprep.subr.mxu0 0.0
    %648 = vmatpush1.msra.mxu0 0.0
    %649 = vmatprep.subr.mxu0 0.0
    %650 = vmatpush1.msra.mxu0 0.0
    %651 = vmatprep.subr.mxu0 0.0
    %652 = vmatpush1.msra.mxu0 0.0
    %653 = vmatprep.subr.mxu0 0.0
    %654 = vmatpush1.msra.mxu0 0.0
    %655 = vmatprep.subr.mxu0 0.0
    %656 = vmatpush1.msra.mxu0 0.0
    %657 = vmatprep.subr.mxu0 0.0
    %658 = vmatpush1.msra.mxu0 0.0
    %659 = vmatprep.subr.mxu0 0.0
    %660 = vmatpush1.msra.mxu0 0.0
    %661 = vmatprep.subr.mxu0 0.0
    %662 = vmatpush1.msra.mxu0 0.0
    %663 = vmatprep.subr.mxu0 0.0
    %664 = vmatpush1.msra.mxu0 0.0
    %665 = vmatprep.mubr.f32.mxu0 0.0
    %v666 = vand.u32 %v561, 4294901760
    %v667 = vsub.f32 %v561, %v666
    %v668 = vand.u32 %v667, 4294901760
    %v669 = vsub.f32 %v667, %v668
    %v670 = vand.u32 %v669, 4294901760
    %671 = vmatmul.mubr.f32.gmra.mrb[0].mxu0 %v670
    %v672 = vpop.f32.mrb[0].mxu0
    %v673 = vadd.f32 %v583, %v672
    %v674 = vpop.f32.mrb[0].mxu0
    %675 = vdwg.mxu0
    %676 = vmatprep.subr.mxu0 0.0
    %v677 = vand.u32 %v562, 4294901760
    %v678 = vsub.f32 %v562, %v677
    %v679 = vand.u32 %v678, 4294901760
    %v680 = vsub.f32 %v678, %v679
    %v681 = vand.u32 %v680, 4294901760
    %682 = vmatpush1.msra.mxu0 %v681
    %683 = vmatprep.subr.mxu0 0.0
    %v684 = vand.u32 %v563, 4294901760
    %v685 = vsub.f32 %v563, %v684
    %v686 = vand.u32 %v685, 4294901760
    %v687 = vsub.f32 %v685, %v686
    %v688 = vand.u32 %v687, 4294901760
    %689 = vmatpush1.msra.mxu0 %v688
    %690 = vmatprep.subr.mxu0 0.0
    %v691 = vand.u32 %v564, 4294901760
    %v692 = vsub.f32 %v564, %v691
    %v693 = vand.u32 %v692, 4294901760
    %v694 = vsub.f32 %v692, %v693
    %v695 = vand.u32 %v694, 4294901760
    %696 = vmatpush1.msra.mxu0 %v695
    %697 = vmatprep.subr.mxu0 0.0
    %v698 = vand.u32 %v565, 4294901760
    %v699 = vsub.f32 %v565, %v698
    %v700 = vand.u32 %v699, 4294901760
    %v701 = vsub.f32 %v699, %v700
    %v702 = vand.u32 %v701, 4294901760
    %703 = vmatpush1.msra.mxu0 %v702
    %704 = vmatprep.subr.mxu0 0.0
    %v705 = vand.u32 %v566, 4294901760
    %v706 = vsub.f32 %v566, %v705
    %v707 = vand.u32 %v706, 4294901760
    %v708 = vsub.f32 %v706, %v707
    %v709 = vand.u32 %v708, 4294901760
    %710 = vmatpush1.msra.mxu0 %v709
    %711 = vmatprep.subr.mxu0 0.0
    %v712 = vand.u32 %v567, 4294901760
    %v713 = vsub.f32 %v567, %v712
    %v714 = vand.u32 %v713, 4294901760
    %v715 = vsub.f32 %v713, %v714
    %v716 = vand.u32 %v715, 4294901760
    %717 = vmatpush1.msra.mxu0 %v716
    %718 = vmatprep.subr.mxu0 0.0
    %v719 = vand.u32 %v568, 4294901760
    %v720 = vsub.f32 %v568, %v719
    %v721 = vand.u32 %v720, 4294901760
    %v722 = vsub.f32 %v720, %v721
    %v723 = vand.u32 %v722, 4294901760
    %724 = vmatpush1.msra.mxu0 %v723
    %725 = vmatprep.subr.mxu0 0.0
    %v726 = vand.u32 %v569, 4294901760
    %v727 = vsub.f32 %v569, %v726
    %v728 = vand.u32 %v727, 4294901760
    %v729 = vsub.f32 %v727, %v728
    %v730 = vand.u32 %v729, 4294901760
    %731 = vmatpush1.msra.mxu0 %v730
    %732 = vmatprep.subr.mxu0 0.0
    %v733 = vand.u32 %v570, 4294901760
    %v734 = vsub.f32 %v570, %v733
    %v735 = vand.u32 %v734, 4294901760
    %v736 = vsub.f32 %v734, %v735
    %v737 = vand.u32 %v736, 4294901760
    %738 = vmatpush1.msra.mxu0 %v737
    %739 = vmatprep.subr.mxu0 0.0
    %v740 = vand.u32 %v571, 4294901760
    %v741 = vsub.f32 %v571, %v740
    %v742 = vand.u32 %v741, 4294901760
    %v743 = vsub.f32 %v741, %v742
    %v744 = vand.u32 %v743, 4294901760
    %745 = vmatpush1.msra.mxu0 %v744
    %746 = vmatprep.subr.mxu0 0.0
    %v747 = vand.u32 %v572, 4294901760
    %v748 = vsub.f32 %v572, %v747
    %v749 = vand.u32 %v748, 4294901760
    %v750 = vsub.f32 %v748, %v749
    %v751 = vand.u32 %v750, 4294901760
    %752 = vmatpush1.msra.mxu0 %v751
    %753 = vmatprep.subr.mxu0 0.0
    %v754 = vand.u32 %v573, 4294901760
    %v755 = vsub.f32 %v573, %v754
    %v756 = vand.u32 %v755, 4294901760
    %v757 = vsub.f32 %v755, %v756
    %v758 = vand.u32 %v757, 4294901760
    %759 = vmatpush1.msra.mxu0 %v758
    %760 = vmatprep.subr.mxu0 0.0
    %v761 = vand.u32 %v574, 4294901760
    %v762 = vsub.f32 %v574, %v761
    %v763 = vand.u32 %v762, 4294901760
    %v764 = vsub.f32 %v762, %v763
    %v765 = vand.u32 %v764, 4294901760
    %766 = vmatpush1.msra.mxu0 %v765
    %767 = vmatprep.subr.mxu0 0.0
    %v768 = vand.u32 %v575, 4294901760
    %v769 = vsub.f32 %v575, %v768
    %v770 = vand.u32 %v769, 4294901760
    %v771 = vsub.f32 %v769, %v770
    %v772 = vand.u32 %v771, 4294901760
    %773 = vmatpush1.msra.mxu0 %v772
    %774 = vmatprep.subr.mxu0 0.0
    %v775 = vand.u32 %v576, 4294901760
    %v776 = vsub.f32 %v576, %v775
    %v777 = vand.u32 %v776, 4294901760
    %v778 = vsub.f32 %v776, %v777
    %v779 = vand.u32 %v778, 4294901760
    %780 = vmatpush1.msra.mxu0 %v779
    %781 = vmatprep.subr.mxu0 0.0
    %v782 = vand.u32 %v577, 4294901760
    %v783 = vsub.f32 %v577, %v782
    %v784 = vand.u32 %v783, 4294901760
    %v785 = vsub.f32 %v783, %v784
    %v786 = vand.u32 %v785, 4294901760
    %787 = vmatpush1.msra.mxu0 %v786
    %788 = vmatprep.subr.mxu0 0.0
    %789 = vmatpush1.msra.mxu0 0.0
    %790 = vmatprep.subr.mxu0 0.0
    %791 = vmatpush1.msra.mxu0 0.0
    %792 = vmatprep.subr.mxu0 0.0
    %793 = vmatpush1.msra.mxu0 0.0
    %794 = vmatprep.subr.mxu0 0.0
    %795 = vmatpush1.msra.mxu0 0.0
    %796 = vmatprep.subr.mxu0 0.0
    %797 = vmatpush1.msra.mxu0 0.0
    %798 = vmatprep.subr.mxu0 0.0
    %799 = vmatpush1.msra.mxu0 0.0
    %800 = vmatprep.subr.mxu0 0.0
    %801 = vmatpush1.msra.mxu0 0.0
    %802 = vmatprep.subr.mxu0 0.0
    %803 = vmatpush1.msra.mxu0 0.0
    %804 = vmatprep.subr.mxu0 0.0
    %805 = vmatpush1.msra.mxu0 0.0
    %806 = vmatprep.subr.mxu0 0.0
    %807 = vmatpush1.msra.mxu0 0.0
    %808 = vmatprep.subr.mxu0 0.0
    %809 = vmatpush1.msra.mxu0 0.0
    %810 = vmatprep.subr.mxu0 0.0
    %811 = vmatpush1.msra.mxu0 0.0
    %812 = vmatprep.subr.mxu0 0.0
    %813 = vmatpush1.msra.mxu0 0.0
    %814 = vmatprep.subr.mxu0 0.0
    %815 = vmatpush1.msra.mxu0 0.0
    %816 = vmatprep.subr.mxu0 0.0
    %817 = vmatpush1.msra.mxu0 0.0
    %818 = vmatprep.subr.mxu0 0.0
    %819 = vmatpush1.msra.mxu0 0.0
    %820 = vmatprep.mubr.f32.mxu0 0.0
    %v821 = vand.u32 %v561, 4294901760
    %822 = vmatmul.mubr.f32.gmra.mrb[0].mxu0 %v821
    %v823 = vpop.f32.mrb[0].mxu0
    %v824 = vadd.f32 %v673, %v823
    %v825 = vpop.f32.mrb[0].mxu0
    %826 = vdwg.mxu0
    %827 = vmatprep.subr.mxu0 0.0
    %v828 = vand.u32 %v562, 4294901760
    %v829 = vsub.f32 %v562, %v828
    %830 = vmatpush1.msra.mxu0 %v829
    %831 = vmatprep.subr.mxu0 0.0
    %v832 = vand.u32 %v563, 4294901760
    %v833 = vsub.f32 %v563, %v832
    %834 = vmatpush1.msra.mxu0 %v833
    %835 = vmatprep.subr.mxu0 0.0
    %v836 = vand.u32 %v564, 4294901760
    %v837 = vsub.f32 %v564, %v836
    %838 = vmatpush1.msra.mxu0 %v837
    %839 = vmatprep.subr.mxu0 0.0
    %v840 = vand.u32 %v565, 4294901760
    %v841 = vsub.f32 %v565, %v840
    %842 = vmatpush1.msra.mxu0 %v841
    %843 = vmatprep.subr.mxu0 0.0
    %v844 = vand.u32 %v566, 4294901760
    %v845 = vsub.f32 %v566, %v844
    %846 = vmatpush1.msra.mxu0 %v845
    %847 = vmatprep.subr.mxu0 0.0
    %v848 = vand.u32 %v567, 4294901760
    %v849 = vsub.f32 %v567, %v848
    %850 = vmatpush1.msra.mxu0 %v849
    %851 = vmatprep.subr.mxu0 0.0
    %v852 = vand.u32 %v568, 4294901760
    %v853 = vsub.f32 %v568, %v852
    %854 = vmatpush1.msra.mxu0 %v853
    %855 = vmatprep.subr.mxu0 0.0
    %v856 = vand.u32 %v569, 4294901760
    %v857 = vsub.f32 %v569, %v856
    %858 = vmatpush1.msra.mxu0 %v857
    %859 = vmatprep.subr.mxu0 0.0
    %v860 = vand.u32 %v570, 4294901760
    %v861 = vsub.f32 %v570, %v860
    %862 = vmatpush1.msra.mxu0 %v861
    %863 = vmatprep.subr.mxu0 0.0
    %v864 = vand.u32 %v571, 4294901760
    %v865 = vsub.f32 %v571, %v864
    %866 = vmatpush1.msra.mxu0 %v865
    %867 = vmatprep.subr.mxu0 0.0
    %v868 = vand.u32 %v572, 4294901760
    %v869 = vsub.f32 %v572, %v868
    %870 = vmatpush1.msra.mxu0 %v869
    %871 = vmatprep.subr.mxu0 0.0
    %v872 = vand.u32 %v573, 4294901760
    %v873 = vsub.f32 %v573, %v872
    %874 = vmatpush1.msra.mxu0 %v873
    %875 = vmatprep.subr.mxu0 0.0
    %v876 = vand.u32 %v574, 4294901760
    %v877 = vsub.f32 %v574, %v876
    %878 = vmatpush1.msra.mxu0 %v877
    %879 = vmatprep.subr.mxu0 0.0
    %v880 = vand.u32 %v575, 4294901760
    %v881 = vsub.f32 %v575, %v880
    %882 = vmatpush1.msra.mxu0 %v881
    %883 = vmatprep.subr.mxu0 0.0
    %v884 = vand.u32 %v576, 4294901760
    %v885 = vsub.f32 %v576, %v884
    %886 = vmatpush1.msra.mxu0 %v885
    %887 = vmatprep.subr.mxu0 0.0
    %v888 = vand.u32 %v577, 4294901760
    %v889 = vsub.f32 %v577, %v888
    %890 = vmatpush1.msra.mxu0 %v889
    %891 = vmatprep.subr.mxu0 0.0
    %892 = vmatpush1.msra.mxu0 0.0
    %893 = vmatprep.subr.mxu0 0.0
    %894 = vmatpush1.msra.mxu0 0.0
    %895 = vmatprep.subr.mxu0 0.0
    %896 = vmatpush1.msra.mxu0 0.0
    %897 = vmatprep.subr.mxu0 0.0
    %898 = vmatpush1.msra.mxu0 0.0
    %899 = vmatprep.subr.mxu0 0.0
    %900 = vmatpush1.msra.mxu0 0.0
    %901 = vmatprep.subr.mxu0 0.0
    %902 = vmatpush1.msra.mxu0 0.0
    %903 = vmatprep.subr.mxu0 0.0
    %904 = vmatpush1.msra.mxu0 0.0
    %905 = vmatprep.subr.mxu0 0.0
    %906 = vmatpush1.msra.mxu0 0.0
    %907 = vmatprep.subr.mxu0 0.0
    %908 = vmatpush1.msra.mxu0 0.0
    %909 = vmatprep.subr.mxu0 0.0
    %910 = vmatpush1.msra.mxu0 0.0
    %911 = vmatprep.subr.mxu0 0.0
    %912 = vmatpush1.msra.mxu0 0.0
    %913 = vmatprep.subr.mxu0 0.0
    %914 = vmatpush1.msra.mxu0 0.0
    %915 = vmatprep.subr.mxu0 0.0
    %916 = vmatpush1.msra.mxu0 0.0
    %917 = vmatprep.subr.mxu0 0.0
    %918 = vmatpush1.msra.mxu0 0.0
    %919 = vmatprep.subr.mxu0 0.0
    %920 = vmatpush1.msra.mxu0 0.0
    %921 = vmatprep.subr.mxu0 0.0
    %922 = vmatpush1.msra.mxu0 0.0
    %923 = vmatprep.mubr.f32.mxu0 0.0
    %v924 = vand.u32 %v561, 4294901760
    %v925 = vsub.f32 %v561, %v924
    %926 = vmatmul.mubr.f32.gmra.mrb[0].mxu0 %v925
    %v927 = vpop.f32.mrb[0].mxu0
    %v928 = vadd.f32 %v824, %v927
    %v929 = vpop.f32.mrb[0].mxu0
    %930 = vdwg.mxu0
    %931 = vmatprep.subr.mxu0 0.0
    %v932 = vand.u32 %v562, 4294901760
    %933 = vmatpush1.msra.mxu0 %v932
    %934 = vmatprep.subr.mxu0 0.0
    %v935 = vand.u32 %v563, 4294901760
    %936 = vmatpush1.msra.mxu0 %v935
    %937 = vmatprep.subr.mxu0 0.0
    %v938 = vand.u32 %v564, 4294901760
    %939 = vmatpush1.msra.mxu0 %v938
    %940 = vmatprep.subr.mxu0 0.0
    %v941 = vand.u32 %v565, 4294901760
    %942 = vmatpush1.msra.mxu0 %v941
    %943 = vmatprep.subr.mxu0 0.0
    %v944 = vand.u32 %v566, 4294901760
    %945 = vmatpush1.msra.mxu0 %v944
    %946 = vmatprep.subr.mxu0 0.0
    %v947 = vand.u32 %v567, 4294901760
    %948 = vmatpush1.msra.mxu0 %v947
    %949 = vmatprep.subr.mxu0 0.0
    %v950 = vand.u32 %v568, 4294901760
    %951 = vmatpush1.msra.mxu0 %v950
    %952 = vmatprep.subr.mxu0 0.0
    %v953 = vand.u32 %v569, 4294901760
    %954 = vmatpush1.msra.mxu0 %v953
    %955 = vmatprep.subr.mxu0 0.0
    %v956 = vand.u32 %v570, 4294901760
    %957 = vmatpush1.msra.mxu0 %v956
    %958 = vmatprep.subr.mxu0 0.0
    %v959 = vand.u32 %v571, 4294901760
    %960 = vmatpush1.msra.mxu0 %v959
    %961 = vmatprep.subr.mxu0 0.0
    %v962 = vand.u32 %v572, 4294901760
    %963 = vmatpush1.msra.mxu0 %v962
    %964 = vmatprep.subr.mxu0 0.0
    %v965 = vand.u32 %v573, 4294901760
    %966 = vmatpush1.msra.mxu0 %v965
    %967 = vmatprep.subr.mxu0 0.0
    %v968 = vand.u32 %v574, 4294901760
    %969 = vmatpush1.msra.mxu0 %v968
    %970 = vmatprep.subr.mxu0 0.0
    %v971 = vand.u32 %v575, 4294901760
    %972 = vmatpush1.msra.mxu0 %v971
    %973 = vmatprep.subr.mxu0 0.0
    %v974 = vand.u32 %v576, 4294901760
    %975 = vmatpush1.msra.mxu0 %v974
    %976 = vmatprep.subr.mxu0 0.0
    %v977 = vand.u32 %v577, 4294901760
    %978 = vmatpush1.msra.mxu0 %v977
    %979 = vmatprep.subr.mxu0 0.0
    %980 = vmatpush1.msra.mxu0 0.0
    %981 = vmatprep.subr.mxu0 0.0
    %982 = vmatpush1.msra.mxu0 0.0
    %983 = vmatprep.subr.mxu0 0.0
    %984 = vmatpush1.msra.mxu0 0.0
    %985 = vmatprep.subr.mxu0 0.0
    %986 = vmatpush1.msra.mxu0 0.0
    %987 = vmatprep.subr.mxu0 0.0
    %988 = vmatpush1.msra.mxu0 0.0
    %989 = vmatprep.subr.mxu0 0.0
    %990 = vmatpush1.msra.mxu0 0.0
    %991 = vmatprep.subr.mxu0 0.0
    %992 = vmatpush1.msra.mxu0 0.0
    %993 = vmatprep.subr.mxu0 0.0
    %994 = vmatpush1.msra.mxu0 0.0
    %995 = vmatprep.subr.mxu0 0.0
    %996 = vmatpush1.msra.mxu0 0.0
    %997 = vmatprep.subr.mxu0 0.0
    %998 = vmatpush1.msra.mxu0 0.0
    %999 = vmatprep.subr.mxu0 0.0
    %1000 = vmatpush1.msra.mxu0 0.0
    %1001 = vmatprep.subr.mxu0 0.0
    %1002 = vmatpush1.msra.mxu0 0.0
    %1003 = vmatprep.subr.mxu0 0.0
    %1004 = vmatpush1.msra.mxu0 0.0
    %1005 = vmatprep.subr.mxu0 0.0
    %1006 = vmatpush1.msra.mxu0 0.0
    %1007 = vmatprep.subr.mxu0 0.0
    %1008 = vmatpush1.msra.mxu0 0.0
    %1009 = vmatprep.subr.mxu0 0.0
    %1010 = vmatpush1.msra.mxu0 0.0
    %1011 = vmatprep.mubr.f32.mxu0 0.0
    %v1012 = vand.u32 %v561, 4294901760
    %v1013 = vsub.f32 %v561, %v1012
    %v1014 = vand.u32 %v1013, 4294901760
    %1015 = vmatmul.mubr.f32.gmra.mrb[0].mxu0 %v1014
    %v1016 = vpop.f32.mrb[0].mxu0
    %v1017 = vadd.f32 %v928, %v1016
    %v1018 = vpop.f32.mrb[0].mxu0
    %1019 = vdwg.mxu0
    %1020 = vmatprep.subr.mxu0 0.0
    %v1021 = vand.u32 %v562, 4294901760
    %v1022 = vsub.f32 %v562, %v1021
    %v1023 = vand.u32 %v1022, 4294901760
    %1024 = vmatpush1.msra.mxu0 %v1023
    %1025 = vmatprep.subr.mxu0 0.0
    %v1026 = vand.u32 %v563, 4294901760
    %v1027 = vsub.f32 %v563, %v1026
    %v1028 = vand.u32 %v1027, 4294901760
    %1029 = vmatpush1.msra.mxu0 %v1028
    %1030 = vmatprep.subr.mxu0 0.0
    %v1031 = vand.u32 %v564, 4294901760
    %v1032 = vsub.f32 %v564, %v1031
    %v1033 = vand.u32 %v1032, 4294901760
    %1034 = vmatpush1.msra.mxu0 %v1033
    %1035 = vmatprep.subr.mxu0 0.0
    %v1036 = vand.u32 %v565, 4294901760
    %v1037 = vsub.f32 %v565, %v1036
    %v1038 = vand.u32 %v1037, 4294901760
    %1039 = vmatpush1.msra.mxu0 %v1038
    %1040 = vmatprep.subr.mxu0 0.0
    %v1041 = vand.u32 %v566, 4294901760
    %v1042 = vsub.f32 %v566, %v1041
    %v1043 = vand.u32 %v1042, 4294901760
    %1044 = vmatpush1.msra.mxu0 %v1043
    %1045 = vmatprep.subr.mxu0 0.0
    %v1046 = vand.u32 %v567, 4294901760
    %v1047 = vsub.f32 %v567, %v1046
    %v1048 = vand.u32 %v1047, 4294901760
    %1049 = vmatpush1.msra.mxu0 %v1048
    %1050 = vmatprep.subr.mxu0 0.0
    %v1051 = vand.u32 %v568, 4294901760
    %v1052 = vsub.f32 %v568, %v1051
    %v1053 = vand.u32 %v1052, 4294901760
    %1054 = vmatpush1.msra.mxu0 %v1053
    %1055 = vmatprep.subr.mxu0 0.0
    %v1056 = vand.u32 %v569, 4294901760
    %v1057 = vsub.f32 %v569, %v1056
    %v1058 = vand.u32 %v1057, 4294901760
    %1059 = vmatpush1.msra.mxu0 %v1058
    %1060 = vmatprep.subr.mxu0 0.0
    %v1061 = vand.u32 %v570, 4294901760
    %v1062 = vsub.f32 %v570, %v1061
    %v1063 = vand.u32 %v1062, 4294901760
    %1064 = vmatpush1.msra.mxu0 %v1063
    %1065 = vmatprep.subr.mxu0 0.0
    %v1066 = vand.u32 %v571, 4294901760
    %v1067 = vsub.f32 %v571, %v1066
    %v1068 = vand.u32 %v1067, 4294901760
    %1069 = vmatpush1.msra.mxu0 %v1068
    %1070 = vmatprep.subr.mxu0 0.0
    %v1071 = vand.u32 %v572, 4294901760
    %v1072 = vsub.f32 %v572, %v1071
    %v1073 = vand.u32 %v1072, 4294901760
    %1074 = vmatpush1.msra.mxu0 %v1073
    %1075 = vmatprep.subr.mxu0 0.0
    %v1076 = vand.u32 %v573, 4294901760
    %v1077 = vsub.f32 %v573, %v1076
    %v1078 = vand.u32 %v1077, 4294901760
    %1079 = vmatpush1.msra.mxu0 %v1078
    %1080 = vmatprep.subr.mxu0 0.0
    %v1081 = vand.u32 %v574, 4294901760
    %v1082 = vsub.f32 %v574, %v1081
    %v1083 = vand.u32 %v1082, 4294901760
    %1084 = vmatpush1.msra.mxu0 %v1083
    %1085 = vmatprep.subr.mxu0 0.0
    %v1086 = vand.u32 %v575, 4294901760
    %v1087 = vsub.f32 %v575, %v1086
    %v1088 = vand.u32 %v1087, 4294901760
    %1089 = vmatpush1.msra.mxu0 %v1088
    %1090 = vmatprep.subr.mxu0 0.0
    %v1091 = vand.u32 %v576, 4294901760
    %v1092 = vsub.f32 %v576, %v1091
    %v1093 = vand.u32 %v1092, 4294901760
    %1094 = vmatpush1.msra.mxu0 %v1093
    %1095 = vmatprep.subr.mxu0 0.0
    %v1096 = vand.u32 %v577, 4294901760
    %v1097 = vsub.f32 %v577, %v1096
    %v1098 = vand.u32 %v1097, 4294901760
    %1099 = vmatpush1.msra.mxu0 %v1098
    %1100 = vmatprep.subr.mxu0 0.0
    %1101 = vmatpush1.msra.mxu0 0.0
    %1102 = vmatprep.subr.mxu0 0.0
    %1103 = vmatpush1.msra.mxu0 0.0
    %1104 = vmatprep.subr.mxu0 0.0
    %1105 = vmatpush1.msra.mxu0 0.0
    %1106 = vmatprep.subr.mxu0 0.0
    %1107 = vmatpush1.msra.mxu0 0.0
    %1108 = vmatprep.subr.mxu0 0.0
    %1109 = vmatpush1.msra.mxu0 0.0
    %1110 = vmatprep.subr.mxu0 0.0
    %1111 = vmatpush1.msra.mxu0 0.0
    %1112 = vmatprep.subr.mxu0 0.0
    %1113 = vmatpush1.msra.mxu0 0.0
    %1114 = vmatprep.subr.mxu0 0.0
    %1115 = vmatpush1.msra.mxu0 0.0
    %1116 = vmatprep.subr.mxu0 0.0
    %1117 = vmatpush1.msra.mxu0 0.0
    %1118 = vmatprep.subr.mxu0 0.0
    %1119 = vmatpush1.msra.mxu0 0.0
    %1120 = vmatprep.subr.mxu0 0.0
    %1121 = vmatpush1.msra.mxu0 0.0
    %1122 = vmatprep.subr.mxu0 0.0
    %1123 = vmatpush1.msra.mxu0 0.0
    %1124 = vmatprep.subr.mxu0 0.0
    %1125 = vmatpush1.msra.mxu0 0.0
    %1126 = vmatprep.subr.mxu0 0.0
    %1127 = vmatpush1.msra.mxu0 0.0
    %1128 = vmatprep.subr.mxu0 0.0
    %1129 = vmatpush1.msra.mxu0 0.0
    %1130 = vmatprep.subr.mxu0 0.0
    %1131 = vmatpush1.msra.mxu0 0.0
    %1132 = vmatprep.mubr.f32.mxu0 0.0
    %v1133 = vand.u32 %v561, 4294901760
    %1134 = vmatmul.mubr.f32.gmra.mrb[0].mxu0 %v1133
    %v1135 = vpop.f32.mrb[0].mxu0
    %v1136 = vadd.f32 %v1017, %v1135
    %v1137 = vpop.f32.mrb[0].mxu0
    %1138 = vdwg.mxu0
    %1139 = vmatprep.subr.mxu0 0.0
    %v1140 = vand.u32 %v562, 4294901760
    %1141 = vmatpush1.msra.mxu0 %v1140
    %1142 = vmatprep.subr.mxu0 0.0
    %v1143 = vand.u32 %v563, 4294901760
    %1144 = vmatpush1.msra.mxu0 %v1143
    %1145 = vmatprep.subr.mxu0 0.0
    %v1146 = vand.u32 %v564, 4294901760
    %1147 = vmatpush1.msra.mxu0 %v1146
    %1148 = vmatprep.subr.mxu0 0.0
    %v1149 = vand.u32 %v565, 4294901760
    %1150 = vmatpush1.msra.mxu0 %v1149
    %1151 = vmatprep.subr.mxu0 0.0
    %v1152 = vand.u32 %v566, 4294901760
    %1153 = vmatpush1.msra.mxu0 %v1152
    %1154 = vmatprep.subr.mxu0 0.0
    %v1155 = vand.u32 %v567, 4294901760
    %1156 = vmatpush1.msra.mxu0 %v1155
    %1157 = vmatprep.subr.mxu0 0.0
    %v1158 = vand.u32 %v568, 4294901760
    %1159 = vmatpush1.msra.mxu0 %v1158
    %1160 = vmatprep.subr.mxu0 0.0
    %v1161 = vand.u32 %v569, 4294901760
    %1162 = vmatpush1.msra.mxu0 %v1161
    %1163 = vmatprep.subr.mxu0 0.0
    %v1164 = vand.u32 %v570, 4294901760
    %1165 = vmatpush1.msra.mxu0 %v1164
    %1166 = vmatprep.subr.mxu0 0.0
    %v1167 = vand.u32 %v571, 4294901760
    %1168 = vmatpush1.msra.mxu0 %v1167
    %1169 = vmatprep.subr.mxu0 0.0
    %v1170 = vand.u32 %v572, 4294901760
    %1171 = vmatpush1.msra.mxu0 %v1170
    %1172 = vmatprep.subr.mxu0 0.0
    %v1173 = vand.u32 %v573, 4294901760
    %1174 = vmatpush1.msra.mxu0 %v1173
    %1175 = vmatprep.subr.mxu0 0.0
    %v1176 = vand.u32 %v574, 4294901760
    %1177 = vmatpush1.msra.mxu0 %v1176
    %1178 = vmatprep.subr.mxu0 0.0
    %v1179 = vand.u32 %v575, 4294901760
    %1180 = vmatpush1.msra.mxu0 %v1179
    %1181 = vmatprep.subr.mxu0 0.0
    %v1182 = vand.u32 %v576, 4294901760
    %1183 = vmatpush1.msra.mxu0 %v1182
    %1184 = vmatprep.subr.mxu0 0.0
    %v1185 = vand.u32 %v577, 4294901760
    %1186 = vmatpush1.msra.mxu0 %v1185
    %1187 = vmatprep.subr.mxu0 0.0
    %1188 = vmatpush1.msra.mxu0 0.0
    %1189 = vmatprep.subr.mxu0 0.0
    %1190 = vmatpush1.msra.mxu0 0.0
    %1191 = vmatprep.subr.mxu0 0.0
    %1192 = vmatpush1.msra.mxu0 0.0
    %1193 = vmatprep.subr.mxu0 0.0
    %1194 = vmatpush1.msra.mxu0 0.0
    %1195 = vmatprep.subr.mxu0 0.0
    %1196 = vmatpush1.msra.mxu0 0.0
    %1197 = vmatprep.subr.mxu0 0.0
    %1198 = vmatpush1.msra.mxu0 0.0
    %1199 = vmatprep.subr.mxu0 0.0
    %1200 = vmatpush1.msra.mxu0 0.0
    %1201 = vmatprep.subr.mxu0 0.0
    %1202 = vmatpush1.msra.mxu0 0.0
    %1203 = vmatprep.subr.mxu0 0.0
    %1204 = vmatpush1.msra.mxu0 0.0
    %1205 = vmatprep.subr.mxu0 0.0
    %1206 = vmatpush1.msra.mxu0 0.0
    %1207 = vmatprep.subr.mxu0 0.0
    %1208 = vmatpush1.msra.mxu0 0.0
    %1209 = vmatprep.subr.mxu0 0.0
    %1210 = vmatpush1.msra.mxu0 0.0
    %1211 = vmatprep.subr.mxu0 0.0
    %1212 = vmatpush1.msra.mxu0 0.0
    %1213 = vmatprep.subr.mxu0 0.0
    %1214 = vmatpush1.msra.mxu0 0.0
    %1215 = vmatprep.subr.mxu0 0.0
    %1216 = vmatpush1.msra.mxu0 0.0
    %1217 = vmatprep.subr.mxu0 0.0
    %1218 = vmatpush1.msra.mxu0 0.0
    %1219 = vmatprep.mubr.f32.mxu0 0.0
    %v1220 = vand.u32 %v561, 4294901760
    %1221 = vmatmul.mubr.f32.gmra.mrb[0].mxu0 %v1220
    %v1222 = vpop.f32.mrb[0].mxu0
    %v1223 = vadd.f32 %v1136, %v1222
    %v1224 = vpop.f32.mrb[0].mxu0
    %1225 = vdwg.mxu0
    %1226 = vmax.xlane.f32.xlu0 %v1223
    %v1227 = vpop.xlane.xlu0 %1226
    %v1228 = vsub.f32 %v1223, %v1227
    %v1229 = vmul.f32 %v1228, 1.442695
    %v1230 = vpow.pop %v1229
    %1231 = vadd.xlane.f32.xlu0 %v1230
    %v1232 = vpop.xlane.xlu0 %1231
    %v1233 = vrcp.pop %v1232
    %v1234 = vmul.f32 %v1230, %v1233
    %vm1235 = vcmask 80896
    %1236 = vst.msk [vmem:[#allocation8] sm:$0xff] %vm1235, %v1234
    // Predicated region
    $region34: #{tpu_custom_call.1} parent=1 // pred_check
      _
    $region35: #{tpu_custom_call.1} parent=1 // pred_check_branch
      %1238 = sbr.rel (0) target = $region37
    $region36: #{tpu_custom_call.1} parent=1 // pred_region
      %s1240 = ssub.s32 128, 128
      %1241 = vsyncadd [#allocation4], %s1240
      %s1243 = sshll.u32 [#allocation8], 4
      %s1244 = int_to_ptr.vmem [resolvable:$true] %s1243
      %1246 = dma.vmem_to_hbm [thread:$0]  %s1244, 128, %s5, [#allocation4]
    $region37: #{tpu_custom_call.1} parent=1 // pred_fallthru
      _
    // Predicated region
    $region38: #{tpu_custom_call.1} parent=1 // pred_check
      _
    $region39: #{tpu_custom_call.1} parent=1 // pred_check_branch
      %1248 = sbr.rel (0) target = $region41
    $region40: #{tpu_custom_call.1} parent=1 // pred_region
      %1249 = dma.done [#allocation4], 128
    $region41: #{tpu_custom_call.1} parent=1 // pred_fallthru
      _
    %1250 = vsyncpa [#allocation3], 1
    %1251 = vsyncpa [#allocation6], 1
    %1252 = vsyncpa [#allocation4], 1

</llo_original>
